<compile_context>
chip_gen: v7x
topology: tpu7x:2x2x1
jax: 0.10.0
libtpu: 0.0.40
codegen_flags: <defaults>
</compile_context>

<pallas_src>
import functools

import jax
import jax.numpy as jnp
from jax.experimental import pallas as pl
from jax.experimental.pallas import tpu as pltpu

EPS = 1e-5


# ------------------------------ small helpers -------------------------------

def _round_up(x, m):
    return (x + m - 1) // m * m


def _pick_tile(total, cands=(512, 256, 128, 64, 32, 16, 8)):
    for c in cands:
        if total % c == 0:
            return c
    return total


def _pad2d(a, rows, cols):
    r, c = a.shape
    return jnp.pad(a, ((0, rows - r), (0, cols - c)))


def _vmem_limit(tile_bytes):
    # double-buffered streams + generous slack, capped below v7x's 64 MiB VMEM
    return int(min(sum(2 * b for b in tile_bytes) + (16 << 20), 48 << 20))


# ------------------------------ kernel bodies --------------------------------

def _matmul_stats_kernel(p_ref, w_ref, y_ref, sum_ref, ssq_ref, acc_ref):
    """Tiled conv-as-matmul (bf16 in, f32 acc) + per-channel sum / sumsq."""
    @pl.when(pl.program_id(2) == 0)
    def _():
        acc_ref[...] = jnp.zeros_like(acc_ref)

    acc_ref[...] += jnp.dot(p_ref[...], w_ref[...],
                            preferred_element_type=jnp.float32)

    @pl.when(pl.program_id(2) == pl.num_programs(2) - 1)
    def _():
        y = acc_ref[...]
        y_ref[...] = y
        # per-(M-tile, Cout-tile) partial stats; cross-tile reduce is tiny and
        # done in the wrapper, keeping the M grid axis "parallel".
        sum_ref[...] = jnp.broadcast_to(
            jnp.sum(y, axis=0, keepdims=True), sum_ref.shape)
        ssq_ref[...] = jnp.broadcast_to(
            jnp.sum(y * y, axis=0, keepdims=True), ssq_ref.shape)


def _bn_relu_kernel(y_ref, s_ref, b_ref, o_ref):
    # folded BN (scale/bias) + ReLU
    o_ref[...] = jnp.maximum(y_ref[...] * s_ref[...] + b_ref[...], 0.0)


def _bn_add_bn_relu_kernel(y_ref, s_ref, b_ref, ysc_ref, ssc_ref, bsc_ref, o_ref):
    # folded BN(main) + folded BN(shortcut) + add + ReLU
    # (identity shortcut passes scale=1, bias=0)
    o_ref[...] = jnp.maximum(
        y_ref[...] * s_ref[...] + b_ref[...]
        + ysc_ref[...] * ssc_ref[...] + bsc_ref[...], 0.0)


# ------------------------------ pallas wrappers -------------------------------

def _conv_matmul_stats(patches, wmat):
    """(M,K) @ (K,Cout) -> padded y (Mp,Cn) f32, per-channel mean/var over the
    true M rows (biased variance, as PyTorch BatchNorm2d in train mode)."""
    M, K = patches.shape
    Cout = wmat.shape[1]
    Kp = _round_up(K, 128)
    Cn = _round_up(Cout, 128)
    tm = min(512, _round_up(M, 8))
    Mp = _round_up(M, tm)
    tk = _pick_tile(Kp, (512, 256, 128))
    tn = _pick_tile(Cn, (512, 256, 128))
    mt, nt, kt = Mp // tm, Cn // tn, Kp // tk

    p = _pad2d(patches, Mp, Kp).astype(jnp.bfloat16)
    w = _pad2d(wmat, Kp, Cn).astype(jnp.bfloat16)

    vmem = _vmem_limit([tm * tk * 2, tk * tn * 2, tm * tn * 4,
                        2 * 8 * tn * 4, tm * tn * 4])

    y, psum, pssq = pl.pallas_call(
        _matmul_stats_kernel,
        grid=(mt, nt, kt),
        in_specs=[pl.BlockSpec((tm, tk), lambda m, n, k: (m, k)),
                  pl.BlockSpec((tk, tn), lambda m, n, k: (k, n))],
        out_specs=(pl.BlockSpec((tm, tn), lambda m, n, k: (m, n)),
                   pl.BlockSpec((8, tn), lambda m, n, k: (m, n)),
                   pl.BlockSpec((8, tn), lambda m, n, k: (m, n))),
        out_shape=(jax.ShapeDtypeStruct((Mp, Cn), jnp.float32),
                   jax.ShapeDtypeStruct((8 * mt, Cn), jnp.float32),
                   jax.ShapeDtypeStruct((8 * mt, Cn), jnp.float32)),
        scratch_shapes=[pltpu.VMEM((tm, tn), jnp.float32)],
        compiler_params=pltpu.CompilerParams(
            dimension_semantics=("parallel", "parallel", "arbitrary"),
            vmem_limit_bytes=vmem),
    )(p, w)

    csum = jnp.sum(psum.reshape(mt, 8, Cn)[:, 0, :], axis=0)
    cssq = jnp.sum(pssq.reshape(mt, 8, Cn)[:, 0, :], axis=0)
    mean = csum / float(M)
    var = cssq / float(M) - mean * mean
    return y, mean, var


def _fold_bn(gamma, beta, mean, var):
    """Fold train-mode BN into per-channel scale/bias (padded channels -> 0)."""
    Cn = mean.shape[0]
    g = jnp.pad(gamma.astype(jnp.float32), (0, Cn - gamma.shape[0]))
    b = jnp.pad(beta.astype(jnp.float32), (0, Cn - beta.shape[0]))
    scale = g * jax.lax.rsqrt(var + EPS)
    bias = b - mean * scale
    return scale.reshape(1, Cn), bias.reshape(1, Cn)


def _bn_relu(y, scale, bias):
    Mp, Cn = y.shape
    tm = _pick_tile(Mp)
    tn = _pick_tile(Cn, (512, 256, 128))
    tile = lambda m, n: (m, n)
    row = lambda m, n: (0, n)
    vmem = _vmem_limit([tm * tn * 4, 2 * tn * 4, tm * tn * 4])
    return pl.pallas_call(
        _bn_relu_kernel,
        grid=(Mp // tm, Cn // tn),
        in_specs=[pl.BlockSpec((tm, tn), tile),
                  pl.BlockSpec((1, tn), row),
                  pl.BlockSpec((1, tn), row)],
        out_specs=pl.BlockSpec((tm, tn), tile),
        out_shape=jax.ShapeDtypeStruct((Mp, Cn), jnp.float32),
        compiler_params=pltpu.CompilerParams(
            dimension_semantics=("parallel", "parallel"),
            vmem_limit_bytes=vmem),
    )(y, scale, bias)


def _bn_add_bn_relu(y, scale, bias, ysc, scale_sc, bias_sc):
    Mp, Cn = y.shape
    tm = _pick_tile(Mp)
    tn = _pick_tile(Cn, (512, 256, 128))
    tile = lambda m, n: (m, n)
    row = lambda m, n: (0, n)
    vmem = _vmem_limit([tm * tn * 4, tm * tn * 4, 4 * tn * 4, tm * tn * 4])
    return pl.pallas_call(
        _bn_add_bn_relu_kernel,
        grid=(Mp // tm, Cn // tn),
        in_specs=[pl.BlockSpec((tm, tn), tile),
                  pl.BlockSpec((1, tn), row),
                  pl.BlockSpec((1, tn), row),
                  pl.BlockSpec((tm, tn), tile),
                  pl.BlockSpec((1, tn), row),
                  pl.BlockSpec((1, tn), row)],
        out_specs=pl.BlockSpec((tm, tn), tile),
        out_shape=jax.ShapeDtypeStruct((Mp, Cn), jnp.float32),
        compiler_params=pltpu.CompilerParams(
            dimension_semantics=("parallel", "parallel"),
            vmem_limit_bytes=vmem),
    )(y, scale, bias, ysc, scale_sc, bias_sc)


# --------------------------------- JAX glue -----------------------------------

def _im2col(x_nhwc, ksize, stride, pad):
    """Extract (kh, kw, cin)-ordered patches -> (N*Ho*Wo, ksize*ksize*Cin)."""
    N, H, W, C = x_nhwc.shape
    xp = jnp.pad(x_nhwc, ((0, 0), (pad, pad), (pad, pad), (0, 0)))
    Ho = (H + 2 * pad - ksize) // stride + 1
    Wo = (W + 2 * pad - ksize) // stride + 1
    cols = []
    for kh in range(ksize):
        for kw in range(ksize):
            patch = xp[:,
                       kh: kh + (Ho - 1) * stride + 1: stride,
                       kw: kw + (Wo - 1) * stride + 1: stride,
                       :]  # (N, Ho, Wo, C)
            cols.append(patch)
    patches = jnp.stack(cols, axis=3)           # (N, Ho, Wo, k*k, C)
    return patches.reshape(N * Ho * Wo, ksize * ksize * C), Ho, Wo


def _w_to_mat(w_oihw):
    """PyTorch (Cout, Cin, Kh, Kw) -> matmul weight (Kh*Kw*Cin, Cout)."""
    Cout, Cin, Kh, Kw = w_oihw.shape
    return jnp.transpose(w_oihw, (2, 3, 1, 0)).reshape(Kh * Kw * Cin, Cout)


@functools.partial(jax.jit, static_argnames=("stride",))
def residual_block_forward(x_nchw, params, *, stride):
    """Forward of ResidualBlock. x_nchw: (N, Cin, H, W) -> (N, Cout, Ho, Wo)."""
    N, Cin, H, W = x_nchw.shape
    Cout = params["conv1_w"].shape[0]
    x = jnp.transpose(x_nchw, (0, 2, 3, 1)).astype(jnp.float32)   # NHWC

    # conv1 (3x3, stride) + BN1 + ReLU
    p1, Ho, Wo = _im2col(x, 3, stride, 1)
    M = N * Ho * Wo
    y1, mean1, var1 = _conv_matmul_stats(p1, _w_to_mat(params["conv1_w"]))
    s1, b1 = _fold_bn(params["bn1_g"], params["bn1_b"], mean1, var1)
    a1 = _bn_relu(y1, s1, b1)[:M, :Cout].reshape(N, Ho, Wo, Cout)

    # conv2 (3x3, stride 1) + BN2
    p2, _, _ = _im2col(a1, 3, 1, 1)
    y2, mean2, var2 = _conv_matmul_stats(p2, _w_to_mat(params["conv2_w"]))
    s2, b2 = _fold_bn(params["bn2_g"], params["bn2_b"], mean2, var2)
    Mp, Cn = y2.shape

    if "sc_w" in params:
        # projection shortcut: 1x1 conv (stride) + BNsc
        xs = x[:, :Ho * stride:stride, :Wo * stride:stride, :].reshape(M, Cin)
        ysc, mean_sc, var_sc = _conv_matmul_stats(xs, _w_to_mat(params["sc_w"]))
        ssc, bsc = _fold_bn(params["bnsc_g"], params["bnsc_b"], mean_sc, var_sc)
    else:
        # identity shortcut (stride == 1, Cin == Cout): unit scale, zero bias
        ysc = _pad2d(x.reshape(M, Cin), Mp, Cn)
        ssc = jnp.ones((1, Cn), jnp.float32)
        bsc = jnp.zeros((1, Cn), jnp.float32)

    out = _bn_add_bn_relu(y2, s2, b2, ysc, ssc, bsc)[:M, :Cout]
    out = out.reshape(N, Ho, Wo, Cout)
    return jnp.transpose(out, (0, 3, 1, 2))   # back to NCHW


# --------------------------------- reference -----------------------------------

def _ref_forward(x, params, stride):
    def conv(x, w, s, pad):
        return jax.lax.conv_general_dilated(
            x, w, (s, s), [(pad, pad), (pad, pad)],
            dimension_numbers=("NCHW", "OIHW", "NCHW"))

    def bn(y, g, b):
        mean = jnp.mean(y, axis=(0, 2, 3), keepdims=True)
        var = jnp.mean(jnp.square(y - mean), axis=(0, 2, 3), keepdims=True)
        return ((y - mean) * jax.lax.rsqrt(var + EPS)
                * g.reshape(1, -1, 1, 1) + b.reshape(1, -1, 1, 1))

    out = jax.nn.relu(bn(conv(x, params["conv1_w"], stride, 1),
                         params["bn1_g"], params["bn1_b"]))
    out = bn(conv(out, params["conv2_w"], 1, 1),
             params["bn2_g"], params["bn2_b"])
    if "sc_w" in params:
        sc = bn(conv(x, params["sc_w"], stride, 0),
                params["bnsc_g"], params["bnsc_b"])
    else:
        sc = x
    return jax.nn.relu(out + sc)


# ----------------------------------- main ---------------------------------------

if __name__ == "__main__":
    key = jax.random.PRNGKey(0)
    N, Cin, Cout, H, W, stride = 2, 4, 8, 16, 16, 2
    keys = jax.random.split(key, 8)

    # deterministic synthetic parameters (shapes per the PyTorch __init__)
    params = {
        "conv1_w": 0.1 * jax.random.normal(keys[0], (Cout, Cin, 3, 3), jnp.float32),
        "bn1_g": 1.0 + 0.1 * jax.random.normal(keys[1], (Cout,), jnp.float32),
        "bn1_b": 0.1 * jax.random.normal(keys[2], (Cout,), jnp.float32),
        "conv2_w": 0.1 * jax.random.normal(keys[3], (Cout, Cout, 3, 3), jnp.float32),
        "bn2_g": 1.0 + 0.1 * jax.random.normal(keys[4], (Cout,), jnp.float32),
        "bn2_b": 0.1 * jax.random.normal(keys[5], (Cout,), jnp.float32),
        # projection shortcut (stride != 1 or Cin != Cout)
        "sc_w": 0.1 * jax.random.normal(keys[6], (Cout, Cin, 1, 1), jnp.float32),
        "bnsc_g": jnp.ones((Cout,), jnp.float32),
        "bnsc_b": jnp.zeros((Cout,), jnp.float32),
    }
    x = jax.random.normal(keys[7], (N, Cin, H, W), jnp.float32)

    out = jax.block_until_ready(residual_block_forward(x, params, stride=stride))
    ref = _ref_forward(x, params, stride)

    assert out.shape == ref.shape == (N, Cout, H // stride, W // stride)
    if not bool(jnp.allclose(out, ref, atol=3e-2, rtol=3e-2)):
        raise AssertionError(
            f"mismatch vs reference, max abs err = {float(jnp.max(jnp.abs(out - ref)))}")

    # also exercise the identity-shortcut variant (stride=1, Cin==Cout)
    params_id = {
        "conv1_w": 0.1 * jax.random.normal(keys[0], (Cin, Cin, 3, 3), jnp.float32),
        "conv2_w": 0.1 * jax.random.normal(keys[3], (Cin, Cin, 3, 3), jnp.float32),
        "bn1_g": params["bn1_g"][:Cin], "bn1_b": params["bn1_b"][:Cin],
        "bn2_g": params["bn2_g"][:Cin], "bn2_b": params["bn2_b"][:Cin],
    }
    out_id = jax.block_until_ready(residual_block_forward(x, params_id, stride=1))
    ref_id = _ref_forward(x, params_id, 1)
    if not bool(jnp.allclose(out_id, ref_id, atol=3e-2, rtol=3e-2)):
        raise AssertionError("identity-shortcut mismatch vs reference")

    print("KERNEL_OK")
</pallas_src>

<mosaic_0001>
module attributes {stable_mosaic.version = 11 : i64} {
  func.func @_bn_relu_kernel(%arg0: i32, %arg1: i32, %arg2: memref<128x128xf32, #tpu.memory_space<vmem>>, %arg3: memref<1x128xf32, #tpu.memory_space<vmem>>, %arg4: memref<1x128xf32, #tpu.memory_space<vmem>>, %arg5: memref<128x128xf32, #tpu.memory_space<vmem>>) attributes {dimension_semantics = [#tpu.dimension_semantics<parallel>, #tpu.dimension_semantics<parallel>], iteration_bounds = array<i64: 1, 1>, scalar_prefetch = 0 : i64, scratch_operands = 0 : i64, tpu.core_type = #tpu.core_type<tc>, window_params = [{transform_indices = @transform_0, window_bounds = array<i64: 128, 128>}, {transform_indices = @transform_1, window_bounds = array<i64: 1, 128>}, {transform_indices = @transform_2, window_bounds = array<i64: 1, 128>}, {transform_indices = @transform_3, window_bounds = array<i64: 128, 128>}]} {
    %c0 = arith.constant 0 : index
    %c0_0 = arith.constant 0 : index
    %0 = vector.load %arg2[%c0, %c0_0] : memref<128x128xf32, #tpu.memory_space<vmem>>, vector<128x128xf32>
    %c0_1 = arith.constant 0 : index
    %c0_2 = arith.constant 0 : index
    %1 = vector.load %arg3[%c0_1, %c0_2] : memref<1x128xf32, #tpu.memory_space<vmem>>, vector<1x128xf32>
    %2 = vector.broadcast %1 : vector<1x128xf32> to vector<128x128xf32>
    %3 = arith.mulf %0, %2 : vector<128x128xf32>
    %c0_3 = arith.constant 0 : index
    %c0_4 = arith.constant 0 : index
    %4 = vector.load %arg4[%c0_3, %c0_4] : memref<1x128xf32, #tpu.memory_space<vmem>>, vector<1x128xf32>
    %5 = vector.broadcast %4 : vector<1x128xf32> to vector<128x128xf32>
    %6 = arith.addf %3, %5 : vector<128x128xf32>
    %cst = arith.constant 0.000000e+00 : f32
    %7 = vector.broadcast %cst : f32 to vector<128x128xf32>
    %8 = arith.maximumf %6, %7 : vector<128x128xf32>
    %c0_5 = arith.constant 0 : index
    %c0_6 = arith.constant 0 : index
    %9 = vector.load %arg5[%c0_5, %c0_6] : memref<128x128xf32, #tpu.memory_space<vmem>>, vector<128x128xf32>
    tpu.vector_store %arg5[%c0_5, %c0_6], %8 {strides = array<i32>} : memref<128x128xf32, #tpu.memory_space<vmem>>, vector<128x128xf32>,
    return
  }
  func.func @transform_0(%arg0: i32, %arg1: i32) -> (i32, i32) {
    %c0_i32 = arith.constant 0 : i32
    return %arg0, %arg1 : i32, i32
  }
  func.func @transform_1(%arg0: i32, %arg1: i32) -> (i32, i32) {
    %c0_i32 = arith.constant 0 : i32
    %c0_i32_0 = arith.constant 0 : i32
    return %c0_i32, %arg1 : i32, i32
  }
  func.func @transform_2(%arg0: i32, %arg1: i32) -> (i32, i32) {
    %c0_i32 = arith.constant 0 : i32
    %c0_i32_0 = arith.constant 0 : i32
    return %c0_i32, %arg1 : i32, i32
  }
  func.func @transform_3(%arg0: i32, %arg1: i32) -> (i32, i32) {
    %c0_i32 = arith.constant 0 : i32
    return %arg0, %arg1 : i32, i32
  }
}

module attributes {stable_mosaic.version = 11 : i64} {
  func.func @_matmul_stats_kernel(%arg0: i32, %arg1: i32, %arg2: i32, %arg3: memref<128x128xbf16, #tpu.memory_space<vmem>>, %arg4: memref<128x128xbf16, #tpu.memory_space<vmem>>, %arg5: memref<128x128xf32, #tpu.memory_space<vmem>>, %arg6: memref<8x128xf32, #tpu.memory_space<vmem>>, %arg7: memref<8x128xf32, #tpu.memory_space<vmem>>, %arg8: memref<128x128xf32, #tpu.memory_space<vmem>>) attributes {dimension_semantics = [#tpu.dimension_semantics<parallel>, #tpu.dimension_semantics<parallel>, #tpu.dimension_semantics<arbitrary>], iteration_bounds = array<i64: 1, 1, 1>, scalar_prefetch = 0 : i64, scratch_operands = 1 : i64, tpu.core_type = #tpu.core_type<tc>, window_params = [{transform_indices = @transform_0, window_bounds = array<i64: 128, 128>}, {transform_indices = @transform_1, window_bounds = array<i64: 128, 128>}, {transform_indices = @transform_2, window_bounds = array<i64: 128, 128>}, {transform_indices = @transform_3, window_bounds = array<i64: 8, 128>}, {transform_indices = @transform_4, window_bounds = array<i64: 8, 128>}]} {
    %c0_i32 = arith.constant 0 : i32
    %0 = arith.cmpi eq, %arg2, %c0_i32 : i32
    %1 = arith.extui %0 : i1 to i32
    %c0_i32_0 = arith.constant 0 : i32
    %2 = arith.cmpi ne, %1, %c0_i32_0 : i32
    scf.if %2 {
      %cst_10 = arith.constant 0.000000e+00 : f32
      %12 = vector.broadcast %cst_10 : f32 to vector<128x128xf32>
      %c0_11 = arith.constant 0 : index
      %c0_12 = arith.constant 0 : index
      %13 = vector.load %arg8[%c0_11, %c0_12] : memref<128x128xf32, #tpu.memory_space<vmem>>, vector<128x128xf32>
      tpu.vector_store %arg8[%c0_11, %c0_12], %12 {strides = array<i32>} : memref<128x128xf32, #tpu.memory_space<vmem>>, vector<128x128xf32>,
    } else {
    }
    %c0 = arith.constant 0 : index
    %c0_1 = arith.constant 0 : index
    %3 = vector.load %arg8[%c0, %c0_1] : memref<128x128xf32, #tpu.memory_space<vmem>>, vector<128x128xf32>
    %c0_2 = arith.constant 0 : index
    %c0_3 = arith.constant 0 : index
    %4 = vector.load %arg3[%c0_2, %c0_3] : memref<128x128xbf16, #tpu.memory_space<vmem>>, vector<128x128xbf16>
    %c0_4 = arith.constant 0 : index
    %c0_5 = arith.constant 0 : index
    %5 = vector.load %arg4[%c0_4, %c0_5] : memref<128x128xbf16, #tpu.memory_space<vmem>>, vector<128x128xbf16>
    %cst = arith.constant dense<0.000000e+00> : vector<128x128xf32>
    %6 = tpu.matmul %4, %5, %cst {dimension_numbers = #tpu.dot_dimension_numbers<[1], [0], [0], [1], [0, 0, 1, 1], [], []>} : vector<128x128xbf16>, vector<128x128xbf16>, vector<128x128xf32> -> vector<128x128xf32>
    %7 = arith.addf %3, %6 : vector<128x128xf32>
    %c0_6 = arith.constant 0 : index
    %c0_7 = arith.constant 0 : index
    %8 = vector.load %arg8[%c0_6, %c0_7] : memref<128x128xf32, #tpu.memory_space<vmem>>, vector<128x128xf32>
    tpu.vector_store %arg8[%c0_6, %c0_7], %7 {strides = array<i32>} : memref<128x128xf32, #tpu.memory_space<vmem>>, vector<128x128xf32>,
    %c0_i32_8 = arith.constant 0 : i32
    %9 = arith.cmpi eq, %arg2, %c0_i32_8 : i32
    %10 = arith.extui %9 : i1 to i32
    %c0_i32_9 = arith.constant 0 : i32
    %11 = arith.cmpi ne, %10, %c0_i32_9 : i32
    scf.if %11 {
      %c0_10 = arith.constant 0 : index
      %c0_11 = arith.constant 0 : index
      %12 = vector.load %arg8[%c0_10, %c0_11] : memref<128x128xf32, #tpu.memory_space<vmem>>, vector<128x128xf32>
      %c0_12 = arith.constant 0 : index
      %c0_13 = arith.constant 0 : index
      %13 = vector.load %arg5[%c0_12, %c0_13] : memref<128x128xf32, #tpu.memory_space<vmem>>, vector<128x128xf32>
      tpu.vector_store %arg5[%c0_12, %c0_13], %12 {strides = array<i32>} : memref<128x128xf32, #tpu.memory_space<vmem>>, vector<128x128xf32>,
      %cst_14 = arith.constant dense<0.000000e+00> : vector<128xf32>
      %14 = vector.multi_reduction <add>, %12, %cst_14 [0] : vector<128x128xf32> to vector<128xf32>
      %15 = vector.shape_cast %14 : vector<128xf32> to vector<1x128xf32>
      %16 = vector.shape_cast %15 : vector<1x128xf32> to vector<1x128xf32>
      %17 = vector.broadcast %16 : vector<1x128xf32> to vector<8x128xf32>
      %c0_15 = arith.constant 0 : index
      %c0_16 = arith.constant 0 : index
      %18 = vector.load %arg6[%c0_15, %c0_16] : memref<8x128xf32, #tpu.memory_space<vmem>>, vector<8x128xf32>
      tpu.vector_store %arg6[%c0_15, %c0_16], %17 {strides = array<i32>} : memref<8x128xf32, #tpu.memory_space<vmem>>, vector<8x128xf32>,
      %19 = arith.mulf %12, %12 : vector<128x128xf32>
      %cst_17 = arith.constant dense<0.000000e+00> : vector<128xf32>
      %20 = vector.multi_reduction <add>, %19, %cst_17 [0] : vector<128x128xf32> to vector<128xf32>
      %21 = vector.shape_cast %20 : vector<128xf32> to vector<1x128xf32>
      %22 = vector.shape_cast %21 : vector<1x128xf32> to vector<1x128xf32>
      %23 = vector.broadcast %22 : vector<1x128xf32> to vector<8x128xf32>
      %c0_18 = arith.constant 0 : index
      %c0_19 = arith.constant 0 : index
      %24 = vector.load %arg7[%c0_18, %c0_19] : memref<8x128xf32, #tpu.memory_space<vmem>>, vector<8x128xf32>
      tpu.vector_store %arg7[%c0_18, %c0_19], %23 {strides = array<i32>} : memref<8x128xf32, #tpu.memory_space<vmem>>, vector<8x128xf32>,
    } else {
    }
    return
  }
  func.func @transform_0(%arg0: i32, %arg1: i32, %arg2: i32) -> (i32, i32) {
    %c0_i32 = arith.constant 0 : i32
    return %arg0, %arg2 : i32, i32
  }
  func.func @transform_1(%arg0: i32, %arg1: i32, %arg2: i32) -> (i32, i32) {
    %c0_i32 = arith.constant 0 : i32
    return %arg2, %arg1 : i32, i32
  }
  func.func @transform_2(%arg0: i32, %arg1: i32, %arg2: i32) -> (i32, i32) {
    %c0_i32 = arith.constant 0 : i32
    return %arg0, %arg1 : i32, i32
  }
  func.func @transform_3(%arg0: i32, %arg1: i32, %arg2: i32) -> (i32, i32) {
    %c0_i32 = arith.constant 0 : i32
    return %arg0, %arg1 : i32, i32
  }
  func.func @transform_4(%arg0: i32, %arg1: i32, %arg2: i32) -> (i32, i32) {
    %c0_i32 = arith.constant 0 : i32
    return %arg0, %arg1 : i32, i32
  }
}

module attributes {stable_mosaic.version = 11 : i64} {
  func.func @_bn_add_bn_relu_kernel(%arg0: i32, %arg1: i32, %arg2: memref<128x128xf32, #tpu.memory_space<vmem>>, %arg3: memref<1x128xf32, #tpu.memory_space<vmem>>, %arg4: memref<1x128xf32, #tpu.memory_space<vmem>>, %arg5: memref<128x128xf32, #tpu.memory_space<vmem>>, %arg6: memref<1x128xf32, #tpu.memory_space<vmem>>, %arg7: memref<1x128xf32, #tpu.memory_space<vmem>>, %arg8: memref<128x128xf32, #tpu.memory_space<vmem>>) attributes {dimension_semantics = [#tpu.dimension_semantics<parallel>, #tpu.dimension_semantics<parallel>], iteration_bounds = array<i64: 1, 1>, scalar_prefetch = 0 : i64, scratch_operands = 0 : i64, tpu.core_type = #tpu.core_type<tc>, window_params = [{transform_indices = @transform_0, window_bounds = array<i64: 128, 128>}, {transform_indices = @transform_1, window_bounds = array<i64: 1, 128>}, {transform_indices = @transform_2, window_bounds = array<i64: 1, 128>}, {transform_indices = @transform_3, window_bounds = array<i64: 128, 128>}, {transform_indices = @transform_4, window_bounds = array<i64: 1, 128>}, {transform_indices = @transform_5, window_bounds = array<i64: 1, 128>}, {transform_indices = @transform_6, window_bounds = array<i64: 128, 128>}]} {
    %c0 = arith.constant 0 : index
    %c0_0 = arith.constant 0 : index
    %0 = vector.load %arg2[%c0, %c0_0] : memref<128x128xf32, #tpu.memory_space<vmem>>, vector<128x128xf32>
    %c0_1 = arith.constant 0 : index
    %c0_2 = arith.constant 0 : index
    %1 = vector.load %arg3[%c0_1, %c0_2] : memref<1x128xf32, #tpu.memory_space<vmem>>, vector<1x128xf32>
    %2 = vector.broadcast %1 : vector<1x128xf32> to vector<128x128xf32>
    %3 = arith.mulf %0, %2 : vector<128x128xf32>
    %c0_3 = arith.constant 0 : index
    %c0_4 = arith.constant 0 : index
    %4 = vector.load %arg4[%c0_3, %c0_4] : memref<1x128xf32, #tpu.memory_space<vmem>>, vector<1x128xf32>
    %5 = vector.broadcast %4 : vector<1x128xf32> to vector<128x128xf32>
    %6 = arith.addf %3, %5 : vector<128x128xf32>
    %c0_5 = arith.constant 0 : index
    %c0_6 = arith.constant 0 : index
    %7 = vector.load %arg5[%c0_5, %c0_6] : memref<128x128xf32, #tpu.memory_space<vmem>>, vector<128x128xf32>
    %c0_7 = arith.constant 0 : index
    %c0_8 = arith.constant 0 : index
    %8 = vector.load %arg6[%c0_7, %c0_8] : memref<1x128xf32, #tpu.memory_space<vmem>>, vector<1x128xf32>
    %9 = vector.broadcast %8 : vector<1x128xf32> to vector<128x128xf32>
    %10 = arith.mulf %7, %9 : vector<128x128xf32>
    %11 = arith.addf %6, %10 : vector<128x128xf32>
    %c0_9 = arith.constant 0 : index
    %c0_10 = arith.constant 0 : index
    %12 = vector.load %arg7[%c0_9, %c0_10] : memref<1x128xf32, #tpu.memory_space<vmem>>, vector<1x128xf32>
    %13 = vector.broadcast %12 : vector<1x128xf32> to vector<128x128xf32>
    %14 = arith.addf %11, %13 : vector<128x128xf32>
    %cst = arith.constant 0.000000e+00 : f32
    %15 = vector.broadcast %cst : f32 to vector<128x128xf32>
    %16 = arith.maximumf %14, %15 : vector<128x128xf32>
    %c0_11 = arith.constant 0 : index
    %c0_12 = arith.constant 0 : index
    %17 = vector.load %arg8[%c0_11, %c0_12] : memref<128x128xf32, #tpu.memory_space<vmem>>, vector<128x128xf32>
    tpu.vector_store %arg8[%c0_11, %c0_12], %16 {strides = array<i32>} : memref<128x128xf32, #tpu.memory_space<vmem>>, vector<128x128xf32>,
    return
  }
  func.func @transform_0(%arg0: i32, %arg1: i32) -> (i32, i32) {
    %c0_i32 = arith.constant 0 : i32
    return %arg0, %arg1 : i32, i32
  }
  func.func @transform_1(%arg0: i32, %arg1: i32) -> (i32, i32) {
    %c0_i32 = arith.constant 0 : i32
    %c0_i32_0 = arith.constant 0 : i32
    return %c0_i32, %arg1 : i32, i32
  }
  func.func @transform_2(%arg0: i32, %arg1: i32) -> (i32, i32) {
    %c0_i32 = arith.constant 0 : i32
    %c0_i32_0 = arith.constant 0 : i32
    return %c0_i32, %arg1 : i32, i32
  }
  func.func @transform_3(%arg0: i32, %arg1: i32) -> (i32, i32) {
    %c0_i32 = arith.constant 0 : i32
    return %arg0, %arg1 : i32, i32
  }
  func.func @transform_4(%arg0: i32, %arg1: i32) -> (i32, i32) {
    %c0_i32 = arith.constant 0 : i32
    %c0_i32_0 = arith.constant 0 : i32
    return %c0_i32, %arg1 : i32, i32
  }
  func.func @transform_5(%arg0: i32, %arg1: i32) -> (i32, i32) {
    %c0_i32 = arith.constant 0 : i32
    %c0_i32_0 = arith.constant 0 : i32
    return %c0_i32, %arg1 : i32, i32
  }
  func.func @transform_6(%arg0: i32, %arg1: i32) -> (i32, i32) {
    %c0_i32 = arith.constant 0 : i32
    return %arg0, %arg1 : i32, i32
  }
}

</mosaic_0001>

<llo_original>
// kernel: residual_block_forward.6
$region0: #{residual_block_forward.6}
  #allocation0 [shape = 'u32[]', space=smem, size = 0x4, offset = 0x4, fixed_abs, tag = 'smem constant byte address 0x4 - core index']
  #allocation1 [shape = 'u32[144,128]{1,0:T(1,128)}', space=vmem, size = 0x12000, scoped, tag = 'internal scratch']
  %s0 = inlined_call_operand.vmem [shape: f32[128,128], index: 0, kind: input, shape index: {}]
  %s1 = inlined_call_operand.vmem [shape: f32[1,128], index: 1, kind: input, shape index: {}]
  %s2 = inlined_call_operand.vmem [shape: f32[1,128], index: 2, kind: input, shape index: {}]
  %s3 = inlined_call_operand.vmem [shape: f32[128,128], index: 3, kind: output, shape index: {}]
  %s4 = sld [smem:[#allocation0]]
  $region22: #{residual_block_forward.6} parent=0
    _
  %s6 = ssub.s32 1, %s4
  %s7 = scalar_select 0, %s6, %s4
  // Predicated region
  $region2: #{residual_block_forward.6} parent=0 // pred_check
    _
  $region3: #{residual_block_forward.6} parent=0 // pred_check_branch
    %9 = sbr.rel (0) target = $region5
  $region4: #{residual_block_forward.6} parent=0 // pred_region
    _
  $region5: #{residual_block_forward.6} parent=0 // pred_fallthru
    _
  // Predicated region
  $region6: #{residual_block_forward.6} parent=0 // pred_check
    _
  $region7: #{residual_block_forward.6} parent=0 // pred_check_branch
    %11 = sbr.rel (0) target = $region9
  $region8: #{residual_block_forward.6} parent=0 // pred_region
    _
  $region9: #{residual_block_forward.6} parent=0 // pred_fallthru
    _
  // Predicated region
  $region10: #{residual_block_forward.6} parent=0 // pred_check
    _
  $region11: #{residual_block_forward.6} parent=0 // pred_check_branch
    %13 = sbr.rel (0) target = $region13
  $region12: #{residual_block_forward.6} parent=0 // pred_region
    _
  $region13: #{residual_block_forward.6} parent=0 // pred_fallthru
    _
  %v14 = vld [vmem:[%s0] sm:$0xff]
  %v15 = vld [vmem:[%s0 + $0x8] sm:$0xff]
  %v16 = vld [vmem:[%s0 + $0x10] sm:$0xff]
  %v17 = vld [vmem:[%s0 + $0x18] sm:$0xff]
  %v18 = vld [vmem:[%s0 + $0x20] sm:$0xff]
  %v19 = vld [vmem:[%s0 + $0x28] sm:$0xff]
  %v20 = vld [vmem:[%s0 + $0x30] sm:$0xff]
  %v21 = vld [vmem:[%s0 + $0x38] sm:$0xff]
  %v22 = vld [vmem:[%s0 + $0x40] sm:$0xff]
  %v23 = vld [vmem:[%s0 + $0x48] sm:$0xff]
  %v24 = vld [vmem:[%s0 + $0x50] sm:$0xff]
  %v25 = vld [vmem:[%s0 + $0x58] sm:$0xff]
  %v26 = vld [vmem:[%s0 + $0x60] sm:$0xff]
  %v27 = vld [vmem:[%s0 + $0x68] sm:$0xff]
  %v28 = vld [vmem:[%s0 + $0x70] sm:$0xff]
  %v29 = vld [vmem:[%s0 + $0x78] sm:$0xff]
  %v30 = vld [vmem:[%s1] sm:$0x1]
  %v32 = vlaneseq
  %v33 = vshrl.u32 %v32, 7
  %v34 = vsub.s32 0, %v33
  %v35 = vrot.slane %v30, %v34
  %v37 = vmul.f32 %v14, %v35
  %v38 = vmul.f32 %v15, %v35
  %v39 = vmul.f32 %v16, %v35
  %v40 = vmul.f32 %v17, %v35
  %v41 = vmul.f32 %v18, %v35
  %v42 = vmul.f32 %v19, %v35
  %v43 = vmul.f32 %v20, %v35
  %v44 = vmul.f32 %v21, %v35
  %v45 = vmul.f32 %v22, %v35
  %v46 = vmul.f32 %v23, %v35
  %v47 = vmul.f32 %v24, %v35
  %v48 = vmul.f32 %v25, %v35
  %v49 = vmul.f32 %v26, %v35
  %v50 = vmul.f32 %v27, %v35
  %v51 = vmul.f32 %v28, %v35
  %v52 = vmul.f32 %v29, %v35
  %v53 = vld [vmem:[%s2] sm:$0x1]
  %v55 = vlaneseq
  %v56 = vshrl.u32 %v55, 7
  %v57 = vsub.s32 0, %v56
  %v58 = vrot.slane %v53, %v57
  %v60 = vadd.f32 %v37, %v58
  %v61 = vadd.f32 %v38, %v58
  %v62 = vadd.f32 %v39, %v58
  %v63 = vadd.f32 %v40, %v58
  %v64 = vadd.f32 %v41, %v58
  %v65 = vadd.f32 %v42, %v58
  %v66 = vadd.f32 %v43, %v58
  %v67 = vadd.f32 %v44, %v58
  %v68 = vadd.f32 %v45, %v58
  %v69 = vadd.f32 %v46, %v58
  %v70 = vadd.f32 %v47, %v58
  %v71 = vadd.f32 %v48, %v58
  %v72 = vadd.f32 %v49, %v58
  %v73 = vadd.f32 %v50, %v58
  %v74 = vadd.f32 %v51, %v58
  %v75 = vadd.f32 %v52, %v58
  %v76 = vmax.f32 %v60, 0.0
  %v77 = vmax.f32 %v61, 0.0
  %v78 = vmax.f32 %v62, 0.0
  %v79 = vmax.f32 %v63, 0.0
  %v80 = vmax.f32 %v64, 0.0
  %v81 = vmax.f32 %v65, 0.0
  %v82 = vmax.f32 %v66, 0.0
  %v83 = vmax.f32 %v67, 0.0
  %v84 = vmax.f32 %v68, 0.0
  %v85 = vmax.f32 %v69, 0.0
  %v86 = vmax.f32 %v70, 0.0
  %v87 = vmax.f32 %v71, 0.0
  %v88 = vmax.f32 %v72, 0.0
  %v89 = vmax.f32 %v73, 0.0
  %v90 = vmax.f32 %v74, 0.0
  %v91 = vmax.f32 %v75, 0.0
  %92 = vst [vmem:[%s3] sm:$0xff] %v76
  %93 = vst [vmem:[%s3 + $0x8] sm:$0xff] %v77
  %94 = vst [vmem:[%s3 + $0x10] sm:$0xff] %v78
  %95 = vst [vmem:[%s3 + $0x18] sm:$0xff] %v79
  %96 = vst [vmem:[%s3 + $0x20] sm:$0xff] %v80
  %97 = vst [vmem:[%s3 + $0x28] sm:$0xff] %v81
  %98 = vst [vmem:[%s3 + $0x30] sm:$0xff] %v82
  %99 = vst [vmem:[%s3 + $0x38] sm:$0xff] %v83
  %100 = vst [vmem:[%s3 + $0x40] sm:$0xff] %v84
  %101 = vst [vmem:[%s3 + $0x48] sm:$0xff] %v85
  %102 = vst [vmem:[%s3 + $0x50] sm:$0xff] %v86
  %103 = vst [vmem:[%s3 + $0x58] sm:$0xff] %v87
  %104 = vst [vmem:[%s3 + $0x60] sm:$0xff] %v88
  %105 = vst [vmem:[%s3 + $0x68] sm:$0xff] %v89
  %106 = vst [vmem:[%s3 + $0x70] sm:$0xff] %v90
  %107 = vst [vmem:[%s3 + $0x78] sm:$0xff] %v91
  // Predicated region
  $region14: #{residual_block_forward.6} parent=0 // pred_check
    _
  $region15: #{residual_block_forward.6} parent=0 // pred_check_branch
    %109 = sbr.rel (0) target = $region17
  $region16: #{residual_block_forward.6} parent=0 // pred_region
    _
  $region17: #{residual_block_forward.6} parent=0 // pred_fallthru
    _
  // Predicated region
  $region18: #{residual_block_forward.6} parent=0 // pred_check
    _
  $region19: #{residual_block_forward.6} parent=0 // pred_check_branch
    %111 = sbr.rel (0) target = $region21
  $region20: #{residual_block_forward.6} parent=0 // pred_region
    _
  $region21: #{residual_block_forward.6} parent=0 // pred_fallthru
    _

// kernel: residual_block_forward.5
$region0: #{residual_block_forward.5}
  #allocation0 [shape = 'u32[]', space=smem, size = 0x4, offset = 0x4, fixed_abs, tag = 'smem constant byte address 0x4 - core index']
  #allocation1 [shape = 'u32[144,128]{1,0:T(1,128)}', space=vmem, size = 0x12000, scoped, tag = 'internal scratch']
  #allocation2 [shape = 'f32[128,128]{1,0:T(8,128)}', space=vmem, size = 0x10000, scoped, tag = 'scratch operand']
  %s0 = inlined_call_operand.vmem [shape: bf16[128,128], index: 0, kind: input, shape index: {}]
  %s1 = inlined_call_operand.vmem [shape: bf16[128,128], index: 1, kind: input, shape index: {}]
  %s2 = inlined_call_operand.vmem [shape: f32[128,128], index: 2, kind: output, shape index: {0}]
  %s3 = inlined_call_operand.vmem [shape: f32[8,128], index: 3, kind: output, shape index: {1}]
  %s4 = inlined_call_operand.vmem [shape: f32[8,128], index: 4, kind: output, shape index: {2}]
  %5 = xla_tuple %s2, %s3, %s4
  %s6 = sld [smem:[#allocation0]]
  $region42: #{residual_block_forward.5} parent=0
    _
  %s8 = ssub.s32 1, %s6
  %s9 = scalar_select 0, %s8, %s6
  // Predicated region
  $region2: #{residual_block_forward.5} parent=0 // pred_check
    _
  $region3: #{residual_block_forward.5} parent=0 // pred_check_branch
    %11 = sbr.rel (0) target = $region5
  $region4: #{residual_block_forward.5} parent=0 // pred_region
    _
  $region5: #{residual_block_forward.5} parent=0 // pred_fallthru
    _
  // Predicated region
  $region6: #{residual_block_forward.5} parent=0 // pred_check
    _
  $region7: #{residual_block_forward.5} parent=0 // pred_check_branch
    %13 = sbr.rel (0) target = $region9
  $region8: #{residual_block_forward.5} parent=0 // pred_region
    _
  $region9: #{residual_block_forward.5} parent=0 // pred_fallthru
    _
  %p15 = scmp.eq.s32.totalorder 0, 0
  // Predicated region
  $region10: #{residual_block_forward.5} parent=0 // pred_check
    %p16 = pneg %p15
  $region11: #{residual_block_forward.5} parent=0 // pred_check_branch
    %18 = sbr.rel (%p16) target = $region13
  $region12: #{residual_block_forward.5} parent=0 // pred_region
    %19 = vst [vmem:[#allocation2] sm:$0xff] 0.0
    %20 = vst [vmem:[#allocation2 + $0x8] sm:$0xff] 0.0
    %21 = vst [vmem:[#allocation2 + $0x10] sm:$0xff] 0.0
    %22 = vst [vmem:[#allocation2 + $0x18] sm:$0xff] 0.0
    %23 = vst [vmem:[#allocation2 + $0x20] sm:$0xff] 0.0
    %24 = vst [vmem:[#allocation2 + $0x28] sm:$0xff] 0.0
    %25 = vst [vmem:[#allocation2 + $0x30] sm:$0xff] 0.0
    %26 = vst [vmem:[#allocation2 + $0x38] sm:$0xff] 0.0
    %27 = vst [vmem:[#allocation2 + $0x40] sm:$0xff] 0.0
    %28 = vst [vmem:[#allocation2 + $0x48] sm:$0xff] 0.0
    %29 = vst [vmem:[#allocation2 + $0x50] sm:$0xff] 0.0
    %30 = vst [vmem:[#allocation2 + $0x58] sm:$0xff] 0.0
    %31 = vst [vmem:[#allocation2 + $0x60] sm:$0xff] 0.0
    %32 = vst [vmem:[#allocation2 + $0x68] sm:$0xff] 0.0
    %33 = vst [vmem:[#allocation2 + $0x70] sm:$0xff] 0.0
    %34 = vst [vmem:[#allocation2 + $0x78] sm:$0xff] 0.0
  $region13: #{residual_block_forward.5} parent=0 // pred_fallthru
    _
  %v35 = vld [vmem:[#allocation2] sm:$0xff]
  %v36 = vld [vmem:[#allocation2 + $0x8] sm:$0xff]
  %v37 = vld [vmem:[#allocation2 + $0x10] sm:$0xff]
  %v38 = vld [vmem:[#allocation2 + $0x18] sm:$0xff]
  %v39 = vld [vmem:[#allocation2 + $0x20] sm:$0xff]
  %v40 = vld [vmem:[#allocation2 + $0x28] sm:$0xff]
  %v41 = vld [vmem:[#allocation2 + $0x30] sm:$0xff]
  %v42 = vld [vmem:[#allocation2 + $0x38] sm:$0xff]
  %v43 = vld [vmem:[#allocation2 + $0x40] sm:$0xff]
  %v44 = vld [vmem:[#allocation2 + $0x48] sm:$0xff]
  %v45 = vld [vmem:[#allocation2 + $0x50] sm:$0xff]
  %v46 = vld [vmem:[#allocation2 + $0x58] sm:$0xff]
  %v47 = vld [vmem:[#allocation2 + $0x60] sm:$0xff]
  %v48 = vld [vmem:[#allocation2 + $0x68] sm:$0xff]
  %v49 = vld [vmem:[#allocation2 + $0x70] sm:$0xff]
  %v50 = vld [vmem:[#allocation2 + $0x78] sm:$0xff]
  %v51 = vld [vmem:[%s0] sm:$0xf]
  %v52 = vld [vmem:[%s0 + $0x4] sm:$0xf]
  %v53 = vld [vmem:[%s0 + $0x8] sm:$0xf]
  %v54 = vld [vmem:[%s0 + $0xc] sm:$0xf]
  %v55 = vld [vmem:[%s0 + $0x10] sm:$0xf]
  %v56 = vld [vmem:[%s0 + $0x14] sm:$0xf]
  %v57 = vld [vmem:[%s0 + $0x18] sm:$0xf]
  %v58 = vld [vmem:[%s0 + $0x1c] sm:$0xf]
  %v59 = vld [vmem:[%s0 + $0x20] sm:$0xf]
  %v60 = vld [vmem:[%s0 + $0x24] sm:$0xf]
  %v61 = vld [vmem:[%s0 + $0x28] sm:$0xf]
  %v62 = vld [vmem:[%s0 + $0x2c] sm:$0xf]
  %v63 = vld [vmem:[%s0 + $0x30] sm:$0xf]
  %v64 = vld [vmem:[%s0 + $0x34] sm:$0xf]
  %v65 = vld [vmem:[%s0 + $0x38] sm:$0xf]
  %v66 = vld [vmem:[%s0 + $0x3c] sm:$0xf]
  %v67 = vld [vmem:[%s1] sm:$0xf]
  %v68 = vld [vmem:[%s1 + $0x4] sm:$0xf]
  %v69 = vld [vmem:[%s1 + $0x8] sm:$0xf]
  %v70 = vld [vmem:[%s1 + $0xc] sm:$0xf]
  %v71 = vld [vmem:[%s1 + $0x10] sm:$0xf]
  %v72 = vld [vmem:[%s1 + $0x14] sm:$0xf]
  %v73 = vld [vmem:[%s1 + $0x18] sm:$0xf]
  %v74 = vld [vmem:[%s1 + $0x1c] sm:$0xf]
  %v75 = vld [vmem:[%s1 + $0x20] sm:$0xf]
  %v76 = vld [vmem:[%s1 + $0x24] sm:$0xf]
  %v77 = vld [vmem:[%s1 + $0x28] sm:$0xf]
  %v78 = vld [vmem:[%s1 + $0x2c] sm:$0xf]
  %v79 = vld [vmem:[%s1 + $0x30] sm:$0xf]
  %v80 = vld [vmem:[%s1 + $0x34] sm:$0xf]
  %v81 = vld [vmem:[%s1 + $0x38] sm:$0xf]
  %v82 = vld [vmem:[%s1 + $0x3c] sm:$0xf]
  %v99 = vunpack.c.l.b16 %v51
  %v100 = vunpack.c.l.b16 %v52
  %v101 = vunpack.c.l.b16 %v53
  %v102 = vunpack.c.l.b16 %v54
  %v103 = vunpack.c.l.b16 %v55
  %v104 = vunpack.c.l.b16 %v56
  %v105 = vunpack.c.l.b16 %v57
  %v106 = vunpack.c.l.b16 %v58
  %v107 = vunpack.c.l.b16 %v59
  %v108 = vunpack.c.l.b16 %v60
  %v109 = vunpack.c.l.b16 %v61
  %v110 = vunpack.c.l.b16 %v62
  %v111 = vunpack.c.l.b16 %v63
  %v112 = vunpack.c.l.b16 %v64
  %v113 = vunpack.c.l.b16 %v65
  %v114 = vunpack.c.l.b16 %v66
  %v115 = vpack.c.b16 %v100, %v99
  %v116 = vpack.c.b16 %v102, %v101
  %v117 = vpack.c.b16 %v104, %v103
  %v118 = vpack.c.b16 %v106, %v105
  %v119 = vpack.c.b16 %v108, %v107
  %v120 = vpack.c.b16 %v110, %v109
  %v121 = vpack.c.b16 %v112, %v111
  %v122 = vpack.c.b16 %v114, %v113
  %v147 = vunpack.c.l.b16 %v67
  %v148 = vunpack.c.l.b16 %v68
  %v149 = vunpack.c.l.b16 %v69
  %v150 = vunpack.c.l.b16 %v70
  %v151 = vunpack.c.l.b16 %v71
  %v152 = vunpack.c.l.b16 %v72
  %v153 = vunpack.c.l.b16 %v73
  %v154 = vunpack.c.l.b16 %v74
  %v155 = vunpack.c.l.b16 %v75
  %v156 = vunpack.c.l.b16 %v76
  %v157 = vunpack.c.l.b16 %v77
  %v158 = vunpack.c.l.b16 %v78
  %v159 = vunpack.c.l.b16 %v79
  %v160 = vunpack.c.l.b16 %v80
  %v161 = vunpack.c.l.b16 %v81
  %v162 = vunpack.c.l.b16 %v82
  %v163 = vpack.c.b16 %v148, %v147
  %v164 = vpack.c.b16 %v150, %v149
  %v165 = vpack.c.b16 %v152, %v151
  %v166 = vpack.c.b16 %v154, %v153
  %v167 = vpack.c.b16 %v156, %v155
  %v168 = vpack.c.b16 %v158, %v157
  %v169 = vpack.c.b16 %v160, %v159
  %v170 = vpack.c.b16 %v162, %v161
  %179 = vmatprep.subr.bf16.mxu0 0
  %180 = vmatpush1.bf16.msra.mxu0 %v163
  %181 = vmatprep.subr.bf16.mxu0 0
  %182 = vmatpush1.bf16.msra.mxu0 %v164
  %183 = vmatprep.subr.bf16.mxu0 0
  %184 = vmatpush1.bf16.msra.mxu0 %v165
  %185 = vmatprep.subr.bf16.mxu0 0
  %186 = vmatpush1.bf16.msra.mxu0 %v166
  %187 = vmatprep.subr.bf16.mxu0 0
  %188 = vmatpush1.bf16.msra.mxu0 %v167
  %189 = vmatprep.subr.bf16.mxu0 0
  %190 = vmatpush1.bf16.msra.mxu0 %v168
  %191 = vmatprep.subr.bf16.mxu0 0
  %192 = vmatpush1.bf16.msra.mxu0 %v169
  %193 = vmatprep.subr.bf16.mxu0 0
  %194 = vmatpush1.bf16.msra.mxu0 %v170
  %195 = vmatprep.subr.bf16.mxu0 0
  %196 = vmatpush1.bf16.msra.mxu0 0
  %197 = vmatprep.subr.bf16.mxu0 0
  %198 = vmatpush1.bf16.msra.mxu0 0
  %199 = vmatprep.subr.bf16.mxu0 0
  %200 = vmatpush1.bf16.msra.mxu0 0
  %201 = vmatprep.subr.bf16.mxu0 0
  %202 = vmatpush1.bf16.msra.mxu0 0
  %203 = vmatprep.subr.bf16.mxu0 0
  %204 = vmatpush1.bf16.msra.mxu0 0
  %205 = vmatprep.subr.bf16.mxu0 0
  %206 = vmatpush1.bf16.msra.mxu0 0
  %207 = vmatprep.subr.bf16.mxu0 0
  %208 = vmatpush1.bf16.msra.mxu0 0
  %209 = vmatprep.subr.bf16.mxu0 0
  %210 = vmatpush1.bf16.msra.mxu0 0
  %211 = vmatprep.mubr.bf16.mxu0 0
  %212 = vmatmul.mubr.bf16.gmra.mrb[0].mxu0 %v115
  %v213 = vpop.f32.mrb[0].mxu0
  %v214 = vadd.f32 0.0, %v213
  %v215 = vpop.f32.mrb[0].mxu0
  %v216 = vpop.f32.mrb[0].mxu0
  %v217 = vadd.f32 0.0, %v216
  %v218 = vpop.f32.mrb[0].mxu0
  %219 = vmatprep.mubr.bf16.mxu0 0
  %220 = vmatmul.mubr.bf16.gmra.mrb[0].mxu0 %v116
  %v221 = vpop.f32.mrb[0].mxu0
  %v222 = vadd.f32 0.0, %v221
  %v223 = vpop.f32.mrb[0].mxu0
  %v224 = vpop.f32.mrb[0].mxu0
  %v225 = vadd.f32 0.0, %v224
  %v226 = vpop.f32.mrb[0].mxu0
  %227 = vmatprep.mubr.bf16.mxu0 0
  %228 = vmatmul.mubr.bf16.gmra.mrb[0].mxu0 %v117
  %v229 = vpop.f32.mrb[0].mxu0
  %v230 = vadd.f32 0.0, %v229
  %v231 = vpop.f32.mrb[0].mxu0
  %v232 = vpop.f32.mrb[0].mxu0
  %v233 = vadd.f32 0.0, %v232
  %v234 = vpop.f32.mrb[0].mxu0
  %235 = vmatprep.mubr.bf16.mxu0 0
  %236 = vmatmul.mubr.bf16.gmra.mrb[0].mxu0 %v118
  %v237 = vpop.f32.mrb[0].mxu0
  %v238 = vadd.f32 0.0, %v237
  %v239 = vpop.f32.mrb[0].mxu0
  %v240 = vpop.f32.mrb[0].mxu0
  %v241 = vadd.f32 0.0, %v240
  %v242 = vpop.f32.mrb[0].mxu0
  %243 = vmatprep.mubr.bf16.mxu0 0
  %244 = vmatmul.mubr.bf16.gmra.mrb[0].mxu0 %v119
  %v245 = vpop.f32.mrb[0].mxu0
  %v246 = vadd.f32 0.0, %v245
  %v247 = vpop.f32.mrb[0].mxu0
  %v248 = vpop.f32.mrb[0].mxu0
  %v249 = vadd.f32 0.0, %v248
  %v250 = vpop.f32.mrb[0].mxu0
  %251 = vmatprep.mubr.bf16.mxu0 0
  %252 = vmatmul.mubr.bf16.gmra.mrb[0].mxu0 %v120
  %v253 = vpop.f32.mrb[0].mxu0
  %v254 = vadd.f32 0.0, %v253
  %v255 = vpop.f32.mrb[0].mxu0
  %v256 = vpop.f32.mrb[0].mxu0
  %v257 = vadd.f32 0.0, %v256
  %v258 = vpop.f32.mrb[0].mxu0
  %259 = vmatprep.mubr.bf16.mxu0 0
  %260 = vmatmul.mubr.bf16.gmra.mrb[0].mxu0 %v121
  %v261 = vpop.f32.mrb[0].mxu0
  %v262 = vadd.f32 0.0, %v261
  %v263 = vpop.f32.mrb[0].mxu0
  %v264 = vpop.f32.mrb[0].mxu0
  %v265 = vadd.f32 0.0, %v264
  %v266 = vpop.f32.mrb[0].mxu0
  %267 = vmatprep.mubr.bf16.mxu0 0
  %268 = vmatmul.mubr.bf16.gmra.mrb[0].mxu0 %v122
  %v269 = vpop.f32.mrb[0].mxu0
  %v270 = vadd.f32 0.0, %v269
  %v271 = vpop.f32.mrb[0].mxu0
  %v272 = vpop.f32.mrb[0].mxu0
  %v273 = vadd.f32 0.0, %v272
  %v274 = vpop.f32.mrb[0].mxu0
  %275 = vdwg.mxu0
  %v276 = vadd.f32 %v35, %v214
  %v277 = vadd.f32 %v36, %v217
  %v278 = vadd.f32 %v37, %v222
  %v279 = vadd.f32 %v38, %v225
  %v280 = vadd.f32 %v39, %v230
  %v281 = vadd.f32 %v40, %v233
  %v282 = vadd.f32 %v41, %v238
  %v283 = vadd.f32 %v42, %v241
  %v284 = vadd.f32 %v43, %v246
  %v285 = vadd.f32 %v44, %v249
  %v286 = vadd.f32 %v45, %v254
  %v287 = vadd.f32 %v46, %v257
  %v288 = vadd.f32 %v47, %v262
  %v289 = vadd.f32 %v48, %v265
  %v290 = vadd.f32 %v49, %v270
  %v291 = vadd.f32 %v50, %v273
  %292 = vst [vmem:[#allocation2] sm:$0xff] %v276
  %293 = vst [vmem:[#allocation2 + $0x8] sm:$0xff] %v277
  %294 = vst [vmem:[#allocation2 + $0x10] sm:$0xff] %v278
  %295 = vst [vmem:[#allocation2 + $0x18] sm:$0xff] %v279
  %296 = vst [vmem:[#allocation2 + $0x20] sm:$0xff] %v280
  %297 = vst [vmem:[#allocation2 + $0x28] sm:$0xff] %v281
  %298 = vst [vmem:[#allocation2 + $0x30] sm:$0xff] %v282
  %299 = vst [vmem:[#allocation2 + $0x38] sm:$0xff] %v283
  %300 = vst [vmem:[#allocation2 + $0x40] sm:$0xff] %v284
  %301 = vst [vmem:[#allocation2 + $0x48] sm:$0xff] %v285
  %302 = vst [vmem:[#allocation2 + $0x50] sm:$0xff] %v286
  %303 = vst [vmem:[#allocation2 + $0x58] sm:$0xff] %v287
  %304 = vst [vmem:[#allocation2 + $0x60] sm:$0xff] %v288
  %305 = vst [vmem:[#allocation2 + $0x68] sm:$0xff] %v289
  %306 = vst [vmem:[#allocation2 + $0x70] sm:$0xff] %v290
  %307 = vst [vmem:[#allocation2 + $0x78] sm:$0xff] %v291
  // Predicated region
  $region14: #{residual_block_forward.5} parent=0 // pred_check
    %p308 = pneg %p15
  $region15: #{residual_block_forward.5} parent=0 // pred_check_branch
    %310 = sbr.rel (%p308) target = $region17
  $region16: #{residual_block_forward.5} parent=0 // pred_region
    %v311 = vld [vmem:[#allocation2] sm:$0xff]
    %v312 = vld [vmem:[#allocation2 + $0x8] sm:$0xff]
    %v313 = vld [vmem:[#allocation2 + $0x10] sm:$0xff]
    %v314 = vld [vmem:[#allocation2 + $0x18] sm:$0xff]
    %v315 = vld [vmem:[#allocation2 + $0x20] sm:$0xff]
    %v316 = vld [vmem:[#allocation2 + $0x28] sm:$0xff]
    %v317 = vld [vmem:[#allocation2 + $0x30] sm:$0xff]
    %v318 = vld [vmem:[#allocation2 + $0x38] sm:$0xff]
    %v319 = vld [vmem:[#allocation2 + $0x40] sm:$0xff]
    %v320 = vld [vmem:[#allocation2 + $0x48] sm:$0xff]
    %v321 = vld [vmem:[#allocation2 + $0x50] sm:$0xff]
    %v322 = vld [vmem:[#allocation2 + $0x58] sm:$0xff]
    %v323 = vld [vmem:[#allocation2 + $0x60] sm:$0xff]
    %v324 = vld [vmem:[#allocation2 + $0x68] sm:$0xff]
    %v325 = vld [vmem:[#allocation2 + $0x70] sm:$0xff]
    %v326 = vld [vmem:[#allocation2 + $0x78] sm:$0xff]
    %327 = vst [vmem:[%s2] sm:$0xff] %v311
    %328 = vst [vmem:[%s2 + $0x8] sm:$0xff] %v312
    %329 = vst [vmem:[%s2 + $0x10] sm:$0xff] %v313
    %330 = vst [vmem:[%s2 + $0x18] sm:$0xff] %v314
    %331 = vst [vmem:[%s2 + $0x20] sm:$0xff] %v315
    %332 = vst [vmem:[%s2 + $0x28] sm:$0xff] %v316
    %333 = vst [vmem:[%s2 + $0x30] sm:$0xff] %v317
    %334 = vst [vmem:[%s2 + $0x38] sm:$0xff] %v318
    %335 = vst [vmem:[%s2 + $0x40] sm:$0xff] %v319
    %336 = vst [vmem:[%s2 + $0x48] sm:$0xff] %v320
    %337 = vst [vmem:[%s2 + $0x50] sm:$0xff] %v321
    %338 = vst [vmem:[%s2 + $0x58] sm:$0xff] %v322
    %339 = vst [vmem:[%s2 + $0x60] sm:$0xff] %v323
    %340 = vst [vmem:[%s2 + $0x68] sm:$0xff] %v324
    %341 = vst [vmem:[%s2 + $0x70] sm:$0xff] %v325
    %342 = vst [vmem:[%s2 + $0x78] sm:$0xff] %v326
    %v343 = vadd.f32 %v311, %v312
    %v344 = vadd.f32 %v343, %v313
    %v345 = vadd.f32 %v344, %v314
    %v346 = vadd.f32 %v345, %v315
    %v347 = vadd.f32 %v346, %v316
    %v348 = vadd.f32 %v347, %v317
    %v349 = vadd.f32 %v348, %v318
    %v350 = vadd.f32 %v349, %v319
    %v351 = vadd.f32 %v350, %v320
    %v352 = vadd.f32 %v351, %v321
    %v353 = vadd.f32 %v352, %v322
    %v354 = vadd.f32 %v353, %v323
    %v355 = vadd.f32 %v354, %v324
    %v356 = vadd.f32 %v355, %v325
    %v357 = vadd.f32 %v356, %v326
    %v358 = vrot.slane %v357, 4
    %v359 = vadd.f32 %v357, %v358
    %v360 = vrot.slane %v359, 2
    %v361 = vadd.f32 %v359, %v360
    %v362 = vrot.slane %v361, 1
    %v363 = vadd.f32 %v361, %v362
    %364 = vst [vmem:[%s3] sm:$0xff] %v363
    %v365 = vmul.f32 %v311, %v311
    %v366 = vmul.f32 %v312, %v312
    %v367 = vmul.f32 %v313, %v313
    %v368 = vmul.f32 %v314, %v314
    %v369 = vmul.f32 %v315, %v315
    %v370 = vmul.f32 %v316, %v316
    %v371 = vmul.f32 %v317, %v317
    %v372 = vmul.f32 %v318, %v318
    %v373 = vmul.f32 %v319, %v319
    %v374 = vmul.f32 %v320, %v320
    %v375 = vmul.f32 %v321, %v321
    %v376 = vmul.f32 %v322, %v322
    %v377 = vmul.f32 %v323, %v323
    %v378 = vmul.f32 %v324, %v324
    %v379 = vmul.f32 %v325, %v325
    %v380 = vmul.f32 %v326, %v326
    %v381 = vadd.f32 %v365, %v366
    %v382 = vadd.f32 %v381, %v367
    %v383 = vadd.f32 %v382, %v368
    %v384 = vadd.f32 %v383, %v369
    %v385 = vadd.f32 %v384, %v370
    %v386 = vadd.f32 %v385, %v371
    %v387 = vadd.f32 %v386, %v372
    %v388 = vadd.f32 %v387, %v373
    %v389 = vadd.f32 %v388, %v374
    %v390 = vadd.f32 %v389, %v375
    %v391 = vadd.f32 %v390, %v376
    %v392 = vadd.f32 %v391, %v377
    %v393 = vadd.f32 %v392, %v378
    %v394 = vadd.f32 %v393, %v379
    %v395 = vadd.f32 %v394, %v380
    %v396 = vrot.slane %v395, 4
    %v397 = vadd.f32 %v395, %v396
    %v398 = vrot.slane %v397, 2
    %v399 = vadd.f32 %v397, %v398
    %v400 = vrot.slane %v399, 1
    %v401 = vadd.f32 %v399, %v400
    %402 = vst [vmem:[%s4] sm:$0xff] %v401
  $region17: #{residual_block_forward.5} parent=0 // pred_fallthru
    _
  // Predicated region
  $region18: #{residual_block_forward.5} parent=0 // pred_check
    _
  $region19: #{residual_block_forward.5} parent=0 // pred_check_branch
    %404 = sbr.rel (0) target = $region21
  $region20: #{residual_block_forward.5} parent=0 // pred_region
    _
  $region21: #{residual_block_forward.5} parent=0 // pred_fallthru
    _
  // Predicated region
  $region22: #{residual_block_forward.5} parent=0 // pred_check
    _
  $region23: #{residual_block_forward.5} parent=0 // pred_check_branch
    %406 = sbr.rel (0) target = $region25
  $region24: #{residual_block_forward.5} parent=0 // pred_region
    _
  $region25: #{residual_block_forward.5} parent=0 // pred_fallthru
    _
  // Predicated region
  $region26: #{residual_block_forward.5} parent=0 // pred_check
    _
  $region27: #{residual_block_forward.5} parent=0 // pred_check_branch
    %408 = sbr.rel (0) target = $region29
  $region28: #{residual_block_forward.5} parent=0 // pred_region
    _
  $region29: #{residual_block_forward.5} parent=0 // pred_fallthru
    _
  // Predicated region
  $region30: #{residual_block_forward.5} parent=0 // pred_check
    _
  $region31: #{residual_block_forward.5} parent=0 // pred_check_branch
    %410 = sbr.rel (0) target = $region33
  $region32: #{residual_block_forward.5} parent=0 // pred_region
    _
  $region33: #{residual_block_forward.5} parent=0 // pred_fallthru
    _
  // Predicated region
  $region34: #{residual_block_forward.5} parent=0 // pred_check
    _
  $region35: #{residual_block_forward.5} parent=0 // pred_check_branch
    %412 = sbr.rel (0) target = $region37
  $region36: #{residual_block_forward.5} parent=0 // pred_region
    _
  $region37: #{residual_block_forward.5} parent=0 // pred_fallthru
    _
  // Predicated region
  $region38: #{residual_block_forward.5} parent=0 // pred_check
    _
  $region39: #{residual_block_forward.5} parent=0 // pred_check_branch
    %414 = sbr.rel (0) target = $region41
  $region40: #{residual_block_forward.5} parent=0 // pred_region
    _
  $region41: #{residual_block_forward.5} parent=0 // pred_fallthru
    _

// kernel: residual_block_forward.9
$region0: #{residual_block_forward.9}
  #allocation0 [shape = 'u32[]', space=smem, size = 0x4, offset = 0x4, fixed_abs, tag = 'smem constant byte address 0x4 - core index']
  #allocation1 [shape = 'u32[144,128]{1,0:T(1,128)}', space=vmem, size = 0x12000, scoped, tag = 'internal scratch']
  %s0 = inlined_call_operand.vmem [shape: f32[128,128], index: 0, kind: input, shape index: {}]
  %s1 = inlined_call_operand.vmem [shape: f32[1,128], index: 1, kind: input, shape index: {}]
  %s2 = inlined_call_operand.vmem [shape: f32[1,128], index: 2, kind: input, shape index: {}]
  %s3 = inlined_call_operand.vmem [shape: f32[128,128], index: 3, kind: input, shape index: {}]
  %s4 = inlined_call_operand.vmem [shape: f32[1,128], index: 4, kind: input, shape index: {}]
  %s5 = inlined_call_operand.vmem [shape: f32[1,128], index: 5, kind: input, shape index: {}]
  %s6 = inlined_call_operand.vmem [shape: f32[128,128], index: 6, kind: output, shape index: {}]
  %s7 = sld [smem:[#allocation0]]
  $region34: #{residual_block_forward.9} parent=0
    _
  %s9 = ssub.s32 1, %s7
  %s10 = scalar_select 0, %s9, %s7
  // Predicated region
  $region2: #{residual_block_forward.9} parent=0 // pred_check
    _
  $region3: #{residual_block_forward.9} parent=0 // pred_check_branch
    %12 = sbr.rel (0) target = $region5
  $region4: #{residual_block_forward.9} parent=0 // pred_region
    _
  $region5: #{residual_block_forward.9} parent=0 // pred_fallthru
    _
  // Predicated region
  $region6: #{residual_block_forward.9} parent=0 // pred_check
    _
  $region7: #{residual_block_forward.9} parent=0 // pred_check_branch
    %14 = sbr.rel (0) target = $region9
  $region8: #{residual_block_forward.9} parent=0 // pred_region
    _
  $region9: #{residual_block_forward.9} parent=0 // pred_fallthru
    _
  // Predicated region
  $region10: #{residual_block_forward.9} parent=0 // pred_check
    _
  $region11: #{residual_block_forward.9} parent=0 // pred_check_branch
    %16 = sbr.rel (0) target = $region13
  $region12: #{residual_block_forward.9} parent=0 // pred_region
    _
  $region13: #{residual_block_forward.9} parent=0 // pred_fallthru
    _
  // Predicated region
  $region14: #{residual_block_forward.9} parent=0 // pred_check
    _
  $region15: #{residual_block_forward.9} parent=0 // pred_check_branch
    %18 = sbr.rel (0) target = $region17
  $region16: #{residual_block_forward.9} parent=0 // pred_region
    _
  $region17: #{residual_block_forward.9} parent=0 // pred_fallthru
    _
  // Predicated region
  $region18: #{residual_block_forward.9} parent=0 // pred_check
    _
  $region19: #{residual_block_forward.9} parent=0 // pred_check_branch
    %20 = sbr.rel (0) target = $region21
  $region20: #{residual_block_forward.9} parent=0 // pred_region
    _
  $region21: #{residual_block_forward.9} parent=0 // pred_fallthru
    _
  // Predicated region
  $region22: #{residual_block_forward.9} parent=0 // pred_check
    _
  $region23: #{residual_block_forward.9} parent=0 // pred_check_branch
    %22 = sbr.rel (0) target = $region25
  $region24: #{residual_block_forward.9} parent=0 // pred_region
    _
  $region25: #{residual_block_forward.9} parent=0 // pred_fallthru
    _
  %v23 = vld [vmem:[%s0] sm:$0xff]
  %v24 = vld [vmem:[%s0 + $0x8] sm:$0xff]
  %v25 = vld [vmem:[%s0 + $0x10] sm:$0xff]
  %v26 = vld [vmem:[%s0 + $0x18] sm:$0xff]
  %v27 = vld [vmem:[%s0 + $0x20] sm:$0xff]
  %v28 = vld [vmem:[%s0 + $0x28] sm:$0xff]
  %v29 = vld [vmem:[%s0 + $0x30] sm:$0xff]
  %v30 = vld [vmem:[%s0 + $0x38] sm:$0xff]
  %v31 = vld [vmem:[%s0 + $0x40] sm:$0xff]
  %v32 = vld [vmem:[%s0 + $0x48] sm:$0xff]
  %v33 = vld [vmem:[%s0 + $0x50] sm:$0xff]
  %v34 = vld [vmem:[%s0 + $0x58] sm:$0xff]
  %v35 = vld [vmem:[%s0 + $0x60] sm:$0xff]
  %v36 = vld [vmem:[%s0 + $0x68] sm:$0xff]
  %v37 = vld [vmem:[%s0 + $0x70] sm:$0xff]
  %v38 = vld [vmem:[%s0 + $0x78] sm:$0xff]
  %v39 = vld [vmem:[%s1] sm:$0x1]
  %v41 = vlaneseq
  %v42 = vshrl.u32 %v41, 7
  %v43 = vsub.s32 0, %v42
  %v44 = vrot.slane %v39, %v43
  %v46 = vmul.f32 %v23, %v44
  %v47 = vmul.f32 %v24, %v44
  %v48 = vmul.f32 %v25, %v44
  %v49 = vmul.f32 %v26, %v44
  %v50 = vmul.f32 %v27, %v44
  %v51 = vmul.f32 %v28, %v44
  %v52 = vmul.f32 %v29, %v44
  %v53 = vmul.f32 %v30, %v44
  %v54 = vmul.f32 %v31, %v44
  %v55 = vmul.f32 %v32, %v44
  %v56 = vmul.f32 %v33, %v44
  %v57 = vmul.f32 %v34, %v44
  %v58 = vmul.f32 %v35, %v44
  %v59 = vmul.f32 %v36, %v44
  %v60 = vmul.f32 %v37, %v44
  %v61 = vmul.f32 %v38, %v44
  %v62 = vld [vmem:[%s2] sm:$0x1]
  %v64 = vlaneseq
  %v65 = vshrl.u32 %v64, 7
  %v66 = vsub.s32 0, %v65
  %v67 = vrot.slane %v62, %v66
  %v69 = vadd.f32 %v46, %v67
  %v70 = vadd.f32 %v47, %v67
  %v71 = vadd.f32 %v48, %v67
  %v72 = vadd.f32 %v49, %v67
  %v73 = vadd.f32 %v50, %v67
  %v74 = vadd.f32 %v51, %v67
  %v75 = vadd.f32 %v52, %v67
  %v76 = vadd.f32 %v53, %v67
  %v77 = vadd.f32 %v54, %v67
  %v78 = vadd.f32 %v55, %v67
  %v79 = vadd.f32 %v56, %v67
  %v80 = vadd.f32 %v57, %v67
  %v81 = vadd.f32 %v58, %v67
  %v82 = vadd.f32 %v59, %v67
  %v83 = vadd.f32 %v60, %v67
  %v84 = vadd.f32 %v61, %v67
  %v85 = vld [vmem:[%s3] sm:$0xff]
  %v86 = vld [vmem:[%s3 + $0x8] sm:$0xff]
  %v87 = vld [vmem:[%s3 + $0x10] sm:$0xff]
  %v88 = vld [vmem:[%s3 + $0x18] sm:$0xff]
  %v89 = vld [vmem:[%s3 + $0x20] sm:$0xff]
  %v90 = vld [vmem:[%s3 + $0x28] sm:$0xff]
  %v91 = vld [vmem:[%s3 + $0x30] sm:$0xff]
  %v92 = vld [vmem:[%s3 + $0x38] sm:$0xff]
  %v93 = vld [vmem:[%s3 + $0x40] sm:$0xff]
  %v94 = vld [vmem:[%s3 + $0x48] sm:$0xff]
  %v95 = vld [vmem:[%s3 + $0x50] sm:$0xff]
  %v96 = vld [vmem:[%s3 + $0x58] sm:$0xff]
  %v97 = vld [vmem:[%s3 + $0x60] sm:$0xff]
  %v98 = vld [vmem:[%s3 + $0x68] sm:$0xff]
  %v99 = vld [vmem:[%s3 + $0x70] sm:$0xff]
  %v100 = vld [vmem:[%s3 + $0x78] sm:$0xff]
  %v101 = vld [vmem:[%s4] sm:$0x1]
  %v103 = vlaneseq
  %v104 = vshrl.u32 %v103, 7
  %v105 = vsub.s32 0, %v104
  %v106 = vrot.slane %v101, %v105
  %v108 = vmul.f32 %v85, %v106
  %v109 = vmul.f32 %v86, %v106
  %v110 = vmul.f32 %v87, %v106
  %v111 = vmul.f32 %v88, %v106
  %v112 = vmul.f32 %v89, %v106
  %v113 = vmul.f32 %v90, %v106
  %v114 = vmul.f32 %v91, %v106
  %v115 = vmul.f32 %v92, %v106
  %v116 = vmul.f32 %v93, %v106
  %v117 = vmul.f32 %v94, %v106
  %v118 = vmul.f32 %v95, %v106
  %v119 = vmul.f32 %v96, %v106
  %v120 = vmul.f32 %v97, %v106
  %v121 = vmul.f32 %v98, %v106
  %v122 = vmul.f32 %v99, %v106
  %v123 = vmul.f32 %v100, %v106
  %v124 = vadd.f32 %v69, %v108
  %v125 = vadd.f32 %v70, %v109
  %v126 = vadd.f32 %v71, %v110
  %v127 = vadd.f32 %v72, %v111
  %v128 = vadd.f32 %v73, %v112
  %v129 = vadd.f32 %v74, %v113
  %v130 = vadd.f32 %v75, %v114
  %v131 = vadd.f32 %v76, %v115
  %v132 = vadd.f32 %v77, %v116
  %v133 = vadd.f32 %v78, %v117
  %v134 = vadd.f32 %v79, %v118
  %v135 = vadd.f32 %v80, %v119
  %v136 = vadd.f32 %v81, %v120
  %v137 = vadd.f32 %v82, %v121
  %v138 = vadd.f32 %v83, %v122
  %v139 = vadd.f32 %v84, %v123
  %v140 = vld [vmem:[%s5] sm:$0x1]
  %v142 = vlaneseq
  %v143 = vshrl.u32 %v142, 7
  %v144 = vsub.s32 0, %v143
  %v145 = vrot.slane %v140, %v144
  %v147 = vadd.f32 %v124, %v145
  %v148 = vadd.f32 %v125, %v145
  %v149 = vadd.f32 %v126, %v145
  %v150 = vadd.f32 %v127, %v145
  %v151 = vadd.f32 %v128, %v145
  %v152 = vadd.f32 %v129, %v145
  %v153 = vadd.f32 %v130, %v145
  %v154 = vadd.f32 %v131, %v145
  %v155 = vadd.f32 %v132, %v145
  %v156 = vadd.f32 %v133, %v145
  %v157 = vadd.f32 %v134, %v145
  %v158 = vadd.f32 %v135, %v145
  %v159 = vadd.f32 %v136, %v145
  %v160 = vadd.f32 %v137, %v145
  %v161 = vadd.f32 %v138, %v145
  %v162 = vadd.f32 %v139, %v145
  %v163 = vmax.f32 %v147, 0.0
  %v164 = vmax.f32 %v148, 0.0
  %v165 = vmax.f32 %v149, 0.0
  %v166 = vmax.f32 %v150, 0.0
  %v167 = vmax.f32 %v151, 0.0
  %v168 = vmax.f32 %v152, 0.0
  %v169 = vmax.f32 %v153, 0.0
  %v170 = vmax.f32 %v154, 0.0
  %v171 = vmax.f32 %v155, 0.0
  %v172 = vmax.f32 %v156, 0.0
  %v173 = vmax.f32 %v157, 0.0
  %v174 = vmax.f32 %v158, 0.0
  %v175 = vmax.f32 %v159, 0.0
  %v176 = vmax.f32 %v160, 0.0
  %v177 = vmax.f32 %v161, 0.0
  %v178 = vmax.f32 %v162, 0.0
  %179 = vst [vmem:[%s6] sm:$0xff] %v163
  %180 = vst [vmem:[%s6 + $0x8] sm:$0xff] %v164
  %181 = vst [vmem:[%s6 + $0x10] sm:$0xff] %v165
  %182 = vst [vmem:[%s6 + $0x18] sm:$0xff] %v166
  %183 = vst [vmem:[%s6 + $0x20] sm:$0xff] %v167
  %184 = vst [vmem:[%s6 + $0x28] sm:$0xff] %v168
  %185 = vst [vmem:[%s6 + $0x30] sm:$0xff] %v169
  %186 = vst [vmem:[%s6 + $0x38] sm:$0xff] %v170
  %187 = vst [vmem:[%s6 + $0x40] sm:$0xff] %v171
  %188 = vst [vmem:[%s6 + $0x48] sm:$0xff] %v172
  %189 = vst [vmem:[%s6 + $0x50] sm:$0xff] %v173
  %190 = vst [vmem:[%s6 + $0x58] sm:$0xff] %v174
  %191 = vst [vmem:[%s6 + $0x60] sm:$0xff] %v175
  %192 = vst [vmem:[%s6 + $0x68] sm:$0xff] %v176
  %193 = vst [vmem:[%s6 + $0x70] sm:$0xff] %v177
  %194 = vst [vmem:[%s6 + $0x78] sm:$0xff] %v178
  // Predicated region
  $region26: #{residual_block_forward.9} parent=0 // pred_check
    _
  $region27: #{residual_block_forward.9} parent=0 // pred_check_branch
    %196 = sbr.rel (0) target = $region29
  $region28: #{residual_block_forward.9} parent=0 // pred_region
    _
  $region29: #{residual_block_forward.9} parent=0 // pred_fallthru
    _
  // Predicated region
  $region30: #{residual_block_forward.9} parent=0 // pred_check
    _
  $region31: #{residual_block_forward.9} parent=0 // pred_check_branch
    %198 = sbr.rel (0) target = $region33
  $region32: #{residual_block_forward.9} parent=0 // pred_region
    _
  $region33: #{residual_block_forward.9} parent=0 // pred_fallthru
    _

</llo_original>
